<compile_context>
chip_gen: v5e
topology: v5e:2x2
jax: 0.10.0
libtpu: 0.0.40
codegen_flags: <defaults>
</compile_context>

<pallas_src>
import functools

import jax
import jax.numpy as jnp
from jax.experimental import pallas as pl
from jax.experimental.pallas import tpu as pltpu


def _round_up(x, m):
    return (x + m - 1) // m * m


# ---------------------------------------------------------------------------
# Single-pass kernel: pool + excitation MLP + rescale for one batch element.
# ---------------------------------------------------------------------------
def _se_fused_kernel(x_ref, w1_ref, b1_ref, w2_ref, b2_ref, o_ref, *, inv_hw):
    # x_ref / o_ref: (C_pad, HW_pad); padded channels / spatial lanes are zero.
    x = x_ref[...]

    # Squeeze: global average pool.  Padded lanes are zero, so sum * 1/true_HW
    # is the exact mean over the real spatial extent.
    pooled = jnp.sum(x, axis=-1, keepdims=True) * inv_hw            # (C_pad, 1)

    # Excitation: fc1 (1x1 conv) + ReLU, fc2 (1x1 conv) + sigmoid.
    # These dots are tiny (width-1 RHS) and are not the bottleneck.
    h = jnp.dot(w1_ref[...], pooled,
                preferred_element_type=jnp.float32) + b1_ref[...]   # (Cr, 1)
    h = jnp.maximum(h, 0.0)
    s = jnp.dot(w2_ref[...], h,
                preferred_element_type=jnp.float32) + b2_ref[...]   # (C_pad, 1)
    s = jax.nn.sigmoid(s)                                           # exp -> EUP

    # Scale: single fused multiply-store (no intermediate VMEM temp), so each
    # output vreg is stored exactly once (matters on v5e's single vst slot).
    o_ref[...] = (x * s).astype(o_ref.dtype)


# ---------------------------------------------------------------------------
# Two-pass fallback: scale-only kernel over lane-dense spatial tiles.
# ---------------------------------------------------------------------------
def _se_scale_kernel(x_ref, s_ref, o_ref):
    # x_ref / o_ref: (C_pad, T_hw); s_ref: (C_pad, 1) per-channel gate.
    o_ref[...] = (x_ref[...] * s_ref[...]).astype(o_ref.dtype)


def se_module(x, w1, b1, w2, b2, *, max_block_bytes=28 * 1024 * 1024):
    """SE forward.  x: (N, C, H, W) f32.  w1: (Cr, C), b1: (Cr, 1),
    w2: (C, Cr), b2: (C, 1)."""
    N, C, H, W = x.shape
    Cr = w1.shape[0]
    HW = H * W
    dtype = x.dtype
    itemsize = jnp.dtype(dtype).itemsize

    C_pad = _round_up(C, 8)       # sublane-dense channels
    HW_pad = _round_up(HW, 128)   # lane-dense spatial axis

    # Zero-pad params along the channel axis so padded channels produce
    # (discarded) zeros and never contaminate the real ones.
    w1p = jnp.pad(w1, ((0, 0), (0, C_pad - C)))            # (Cr, C_pad)
    b1p = b1                                               # (Cr, 1)
    w2p = jnp.pad(w2, ((0, C_pad - C), (0, 0)))            # (C_pad, Cr)
    b2p = jnp.pad(b2, ((0, C_pad - C), (0, 0)))            # (C_pad, 1)

    x_flat = x.reshape(N, C, HW)

    # in + out blocks, double-buffered by the Pallas pipeline.
    fused_block_bytes = 4 * C_pad * HW_pad * itemsize

    if fused_block_bytes <= max_block_bytes:
        # ------------------ single pass: read x once, write once -----------
        xp = jnp.pad(x_flat, ((0, 0), (0, C_pad - C), (0, HW_pad - HW)))
        weight_bytes = 2 * 4 * (w1p.size + b1p.size + w2p.size + b2p.size)
        vmem_limit = min(
            int(1.25 * (fused_block_bytes + weight_bytes)) + (16 << 20),
            64 << 20)  # stay within v7x physical VMEM

        kernel = functools.partial(_se_fused_kernel, inv_hw=1.0 / HW)
        out_p = pl.pallas_call(
            kernel,
            out_shape=jax.ShapeDtypeStruct((N, C_pad, HW_pad), dtype),
            grid_spec=pltpu.PrefetchScalarGridSpec(
                num_scalar_prefetch=0,
                grid=(N,),
                in_specs=[
                    pl.BlockSpec((pl.Squeezed(), C_pad, HW_pad),
                                 lambda n: (n, 0, 0)),
                    pl.BlockSpec((Cr, C_pad), lambda n: (0, 0)),
                    pl.BlockSpec((Cr, 1), lambda n: (0, 0)),
                    pl.BlockSpec((C_pad, Cr), lambda n: (0, 0)),
                    pl.BlockSpec((C_pad, 1), lambda n: (0, 0)),
                ],
                out_specs=pl.BlockSpec((pl.Squeezed(), C_pad, HW_pad),
                                       lambda n: (n, 0, 0)),
            ),
            compiler_params=pltpu.CompilerParams(
                dimension_semantics=("parallel",),
                vmem_limit_bytes=vmem_limit),
        )(xp, w1p, b1p, w2p, b2p)
        return out_p[:, :C, :HW].reshape(N, C, H, W)

    # ------------------ two-pass fallback (large C*HW / v7x VMEM) ----------
    # Pass 1 (plain XLA, tiny): per-(n, c) gate.  Costs ~1 extra read of x
    # (~1.5x HBM traffic) but restores big lane-dense tiles for the scale.
    pooled = x_flat.mean(axis=-1)                                    # (N, C)
    h = jnp.maximum(pooled @ w1.T + b1[:, 0], 0.0)
    gates = jax.nn.sigmoid(h @ w2.T + b2[:, 0])                      # (N, C)
    gates_p = jnp.pad(gates, ((0, 0), (0, C_pad - C)))[:, :, None]   # (N,C_pad,1)

    # Lane-dense spatial tile (multiple of 128) sized against the VMEM budget.
    t_hw = max(128, (max_block_bytes // (4 * C_pad * itemsize)) // 128 * 128)
    hw_tiles = pl.cdiv(HW, t_hw)
    HW_pad2 = hw_tiles * t_hw
    xp = jnp.pad(x_flat, ((0, 0), (0, C_pad - C), (0, HW_pad2 - HW)))

    vmem_limit = min(int(1.25 * 4 * C_pad * t_hw * itemsize) + (16 << 20),
                     64 << 20)
    out_p = pl.pallas_call(
        _se_scale_kernel,
        out_shape=jax.ShapeDtypeStruct((N, C_pad, HW_pad2), dtype),
        grid_spec=pltpu.PrefetchScalarGridSpec(
            num_scalar_prefetch=0,
            grid=(N, hw_tiles),   # two parallel axes -> both v7x TCs get work
            in_specs=[
                pl.BlockSpec((pl.Squeezed(), C_pad, t_hw),
                             lambda n, t: (n, 0, t)),
                pl.BlockSpec((pl.Squeezed(), C_pad, 1),
                             lambda n, t: (n, 0, 0)),
            ],
            out_specs=pl.BlockSpec((pl.Squeezed(), C_pad, t_hw),
                                   lambda n, t: (n, 0, t)),
        ),
        compiler_params=pltpu.CompilerParams(
            dimension_semantics=("parallel", "parallel"),
            vmem_limit_bytes=vmem_limit),
    )(xp, gates_p)
    return out_p[:, :C, :HW].reshape(N, C, H, W)


def se_module_ref(x, w1, b1, w2, b2):
    """Pure-JAX reference matching the PyTorch forward."""
    N, C, H, W = x.shape
    pooled = x.reshape(N, C, -1).mean(-1)                 # (N, C)
    h = jnp.maximum(pooled @ w1.T + b1[:, 0], 0.0)        # (N, Cr)
    s = jax.nn.sigmoid(h @ w2.T + b2[:, 0])               # (N, C)
    return x * s[:, :, None, None]


if __name__ == "__main__":
    # Small shapes consistent with SEModule(channels=4, reduction=2).
    N, C, H, W = 2, 4, 16, 16
    reduction = 2
    Cr = C // reduction

    key = jax.random.PRNGKey(0)
    kx, k1, k2, k3, k4 = jax.random.split(key, 5)

    x = jax.random.normal(kx, (N, C, H, W), dtype=jnp.float32)
    # 1x1-conv weights flattened to matrices, matching nn.Conv2d(k=1).
    w1 = jax.random.normal(k1, (Cr, C), dtype=jnp.float32) * 0.1
    b1 = jax.random.normal(k2, (Cr, 1), dtype=jnp.float32) * 0.1
    w2 = jax.random.normal(k3, (C, Cr), dtype=jnp.float32) * 0.1
    b2 = jax.random.normal(k4, (C, 1), dtype=jnp.float32) * 0.1

    ref = se_module_ref(x, w1, b1, w2, b2)

    # Single-pass (fused) path.
    out = jax.block_until_ready(se_module(x, w1, b1, w2, b2))
    assert out.shape == (N, C, H, W)
    assert jnp.allclose(out, ref, atol=2e-5, rtol=2e-5), "fused path mismatch"

    # Force the two-pass / spatially-tiled path so it is exercised too.
    out2 = jax.block_until_ready(
        se_module(x, w1, b1, w2, b2, max_block_bytes=16 * 1024))
    assert jnp.allclose(out2, ref, atol=2e-5, rtol=2e-5), "tiled path mismatch"

    print("KERNEL_OK")
</pallas_src>

<mosaic_0001>
module attributes {stable_mosaic.version = 11 : i64} {
  func.func @_se_fused_kernel(%arg0: i32, %arg1: memref<1x8x256xf32, #tpu.memory_space<vmem>>, %arg2: memref<2x8xf32, #tpu.memory_space<vmem>>, %arg3: memref<2x1xf32, #tpu.memory_space<vmem>>, %arg4: memref<8x2xf32, #tpu.memory_space<vmem>>, %arg5: memref<8x1xf32, #tpu.memory_space<vmem>>, %arg6: memref<1x8x256xf32, #tpu.memory_space<vmem>>) attributes {dimension_semantics = [#tpu.dimension_semantics<parallel>], iteration_bounds = array<i64: 2>, scalar_prefetch = 0 : i64, scratch_operands = 0 : i64, tpu.core_type = #tpu.core_type<tc>, window_params = [{transform_indices = @transform_0, window_bounds = array<i64: 1, 8, 256>}, {pipeline_mode = #tpu.pipeline_mode<synchronous>, transform_indices = @transform_1, window_bounds = array<i64: 2, 8>}, {pipeline_mode = #tpu.pipeline_mode<synchronous>, transform_indices = @transform_2, window_bounds = array<i64: 2, 1>}, {pipeline_mode = #tpu.pipeline_mode<synchronous>, transform_indices = @transform_3, window_bounds = array<i64: 8, 2>}, {pipeline_mode = #tpu.pipeline_mode<synchronous>, transform_indices = @transform_4, window_bounds = array<i64: 8, 1>}, {transform_indices = @transform_5, window_bounds = array<i64: 1, 8, 256>}]} {
    %c0 = arith.constant 0 : index
    %c0_0 = arith.constant 0 : index
    %c0_1 = arith.constant 0 : index
    %0 = vector.load %arg1[%c0, %c0_0, %c0_1] : memref<1x8x256xf32, #tpu.memory_space<vmem>>, vector<1x8x256xf32>
    %1 = vector.shape_cast %0 : vector<1x8x256xf32> to vector<8x256xf32>
    %cst = arith.constant dense<0.000000e+00> : vector<8xf32>
    %2 = vector.multi_reduction <add>, %1, %cst [1] : vector<8x256xf32> to vector<8xf32>
    %3 = vector.shape_cast %2 : vector<8xf32> to vector<8x1xf32>
    %cst_2 = arith.constant 3.906250e-03 : f32
    %4 = vector.broadcast %cst_2 : f32 to vector<8x1xf32>
    %5 = arith.mulf %3, %4 : vector<8x1xf32>
    %c0_3 = arith.constant 0 : index
    %c0_4 = arith.constant 0 : index
    %6 = vector.load %arg2[%c0_3, %c0_4] : memref<2x8xf32, #tpu.memory_space<vmem>>, vector<2x8xf32>
    %cst_5 = arith.constant dense<0.000000e+00> : vector<2x1xf32>
    %7 = tpu.matmul %6, %5, %cst_5 {dimension_numbers = #tpu.dot_dimension_numbers<[1], [0], [0], [1], [0, 0, 1, 1], [], []>} : vector<2x8xf32>, vector<8x1xf32>, vector<2x1xf32> -> vector<2x1xf32>
    %c0_6 = arith.constant 0 : index
    %c0_7 = arith.constant 0 : index
    %8 = vector.load %arg3[%c0_6, %c0_7] : memref<2x1xf32, #tpu.memory_space<vmem>>, vector<2x1xf32>
    %9 = arith.addf %7, %8 : vector<2x1xf32>
    %cst_8 = arith.constant 0.000000e+00 : f32
    %10 = vector.broadcast %cst_8 : f32 to vector<2x1xf32>
    %11 = arith.maximumf %9, %10 : vector<2x1xf32>
    %c0_9 = arith.constant 0 : index
    %c0_10 = arith.constant 0 : index
    %12 = vector.load %arg4[%c0_9, %c0_10] : memref<8x2xf32, #tpu.memory_space<vmem>>, vector<8x2xf32>
    %cst_11 = arith.constant dense<0.000000e+00> : vector<8x1xf32>
    %13 = tpu.matmul %12, %11, %cst_11 {dimension_numbers = #tpu.dot_dimension_numbers<[1], [0], [0], [1], [0, 0, 1, 1], [], []>} : vector<8x2xf32>, vector<2x1xf32>, vector<8x1xf32> -> vector<8x1xf32>
    %c0_12 = arith.constant 0 : index
    %c0_13 = arith.constant 0 : index
    %14 = vector.load %arg5[%c0_12, %c0_13] : memref<8x1xf32, #tpu.memory_space<vmem>>, vector<8x1xf32>
    %15 = arith.addf %13, %14 : vector<8x1xf32>
    %16 = arith.negf %15 : vector<8x1xf32>
    %17 = math.exp %16 : vector<8x1xf32>
    %cst_14 = arith.constant 1.000000e+00 : f32
    %18 = vector.broadcast %cst_14 : f32 to vector<8x1xf32>
    %19 = arith.addf %18, %17 : vector<8x1xf32>
    %20 = arith.divf %18, %19 : vector<8x1xf32>
    %21 = vector.broadcast %20 : vector<8x1xf32> to vector<8x256xf32>
    %22 = arith.mulf %1, %21 : vector<8x256xf32>
    %c0_15 = arith.constant 0 : index
    %c0_16 = arith.constant 0 : index
    %c0_17 = arith.constant 0 : index
    %23 = vector.load %arg6[%c0_15, %c0_16, %c0_17] : memref<1x8x256xf32, #tpu.memory_space<vmem>>, vector<1x8x256xf32>
    %24 = vector.shape_cast %23 : vector<1x8x256xf32> to vector<8x256xf32>
    %25 = vector.shape_cast %22 : vector<8x256xf32> to vector<1x8x256xf32>
    tpu.vector_store %arg6[%c0_15, %c0_16, %c0_17], %25 {strides = array<i32>} : memref<1x8x256xf32, #tpu.memory_space<vmem>>, vector<1x8x256xf32>,
    return
  }
  func.func @transform_0(%arg0: i32) -> (i32, i32, i32) {
    %c0_i32 = arith.constant 0 : i32
    %c0_i32_0 = arith.constant 0 : i32
    %c0_i32_1 = arith.constant 0 : i32
    return %arg0, %c0_i32, %c0_i32_0 : i32, i32, i32
  }
  func.func @transform_1(%arg0: i32) -> (i32, i32) {
    %c0_i32 = arith.constant 0 : i32
    %c0_i32_0 = arith.constant 0 : i32
    %c0_i32_1 = arith.constant 0 : i32
    return %c0_i32, %c0_i32_0 : i32, i32
  }
  func.func @transform_2(%arg0: i32) -> (i32, i32) {
    %c0_i32 = arith.constant 0 : i32
    %c0_i32_0 = arith.constant 0 : i32
    %c0_i32_1 = arith.constant 0 : i32
    return %c0_i32, %c0_i32_0 : i32, i32
  }
  func.func @transform_3(%arg0: i32) -> (i32, i32) {
    %c0_i32 = arith.constant 0 : i32
    %c0_i32_0 = arith.constant 0 : i32
    %c0_i32_1 = arith.constant 0 : i32
    return %c0_i32, %c0_i32_0 : i32, i32
  }
  func.func @transform_4(%arg0: i32) -> (i32, i32) {
    %c0_i32 = arith.constant 0 : i32
    %c0_i32_0 = arith.constant 0 : i32
    %c0_i32_1 = arith.constant 0 : i32
    return %c0_i32, %c0_i32_0 : i32, i32
  }
  func.func @transform_5(%arg0: i32) -> (i32, i32, i32) {
    %c0_i32 = arith.constant 0 : i32
    %c0_i32_0 = arith.constant 0 : i32
    %c0_i32_1 = arith.constant 0 : i32
    return %arg0, %c0_i32, %c0_i32_0 : i32, i32, i32
  }
}

</mosaic_0001>

<llo_original>
// kernel: tpu_custom_call.1
$region0: #{tpu_custom_call.1}
  #allocation0 [shape = 'u32[]', space=smem, size = 0x4, offset = 0x4, fixed_abs, tag = 'smem constant byte address 0x4 - core index']
  #allocation1 [shape = 'u32[72,128]{1,0:T(1,128)}', space=vmem, size = 0x9000, scoped, tag = 'internal scratch']
  %s0 = inlined_call_operand.hbm [shape: f32[2,8,256], index: 0, kind: input, shape index: {}]
  %s1 = inlined_call_operand.vmem [shape: f32[2,8], index: 1, kind: input, shape index: {}]
  %s2 = inlined_call_operand.vmem [shape: f32[2,1], index: 2, kind: input, shape index: {}]
  %s3 = inlined_call_operand.vmem [shape: f32[8,2], index: 3, kind: input, shape index: {}]
  %s4 = inlined_call_operand.vmem [shape: f32[8,1], index: 4, kind: input, shape index: {}]
  %s5 = inlined_call_operand.hbm [shape: f32[2,8,256], index: 5, kind: output, shape index: {}]
  %s6 = sld [smem:[#allocation0]]
  $region57: #{tpu_custom_call.1} parent=0
    _
  %s8 = ssub.s32 1, %s6
  %s9 = scalar_select 0, %s8, %s6
  $region1: #{tpu_custom_call.1} parent=0
    #allocation2 [shape = 'u8[16384]{0}', space=vmem, size = 0x4000, scoped, tag = 'input window, operand 0']
    #allocation3 [shape = 's32[2]{0}', space=sflag, size = 0x8, scoped, tag = 'scoped memory for tpu_custom_call.1']
    #allocation4 [shape = 's32[2]{0}', space=sflag, size = 0x8, scoped, tag = 'scoped memory for tpu_custom_call.1']
    #allocation5 [shape = 'u8[16384]{0}', space=vmem, size = 0x4000, scoped, tag = 'output window, operand 0']
    %10 = vsyncpa [#allocation3], 0
    %s11 = scalar_lea.sflag [#allocation3], 1
    %12 = vsyncpa %s11, 0
    %13 = vsyncpa [#allocation4], 0
    %s14 = scalar_lea.sflag [#allocation4], 1
    %15 = vsyncpa %s14, 0
    loop: start=0, step=1, limit=4
    $region2: #{tpu_custom_call.1} parent=1 // loop_pre_header
      _
    $region3: #{tpu_custom_call.1} parent=1 // loop_header
      %s17 = sphi 0, %s21
      %p18 = scmp.ge.s32.totalorder %s17, 4
      %s27 = sphi 0, %s29
      %s30 = sphi 0, %s27
      %s31 = sphi 0, %s30
      %s47 = sphi 0, %s31
      %s51 = sphi 0, %s51
      %s53 = sphi 0, %s51
      %s54 = sphi 0, %s53
      %s68 = sphi 0, %s54
      %s72 = sphi 0, %s72
      %s74 = sphi 0, %s72
      %s75 = sphi 0, %s74
      %s89 = sphi 0, %s75
      %s93 = sphi 0, %s93
      %s95 = sphi 0, %s93
      %s96 = sphi 0, %s95
      %s110 = sphi 0, %s96
      %s114 = sphi 0, %s114
      %s116 = sphi 0, %s114
      %s117 = sphi 0, %s116
      %s131 = sphi 0, %s117
      %s137 = sphi 0, %s139
      %s140 = sphi 0, %s137
      %s141 = sphi 0, %s140
      %s157 = sphi 0, %s141
    $region4: #{tpu_custom_call.1} parent=1 // loop_header_branch
      %20 = sbr.rel (%p18) target = $region8
    $region5: #{tpu_custom_call.1} parent=1 // loop_body
      %s22 = ssub.s32 %s17, 1
      %s23 = ssub.s32 %s17, 2
      %s24 = sadd.s32 %s17, 1
      %s25 = ssub.s32 %s17, %s24
      %p26 = scmp.eq.s32.totalorder %s25, 0
      %s28 = sadd.s32 %s27, 1
      %s29 = scalar_select %p26, %s27, %s28
      %p32 = pneg %p26
      %p33 = scmp.eq.s32.totalorder %s17, 1
      %p34 = por %p32, %p33
      %p35 = scmp.ne.s32.totalorder %s27, %s30
      %p36 = scmp.eq.s32.totalorder %s17, 0
      %p37 = por %p35, %p36
      %p38 = scmp.ne.s32.totalorder %s27, %s30
      %p39 = scmp.eq.s32.totalorder %s22, 1
      %p40 = por %p38, %p39
      %p41 = scmp.ne.s32.totalorder %s30, %s31
      %p42 = scmp.eq.s32.totalorder %s22, 0
      %p43 = por %p41, %p42
      %p44 = scmp.ne.s32.totalorder %s30, %s31
      %p45 = scmp.eq.s32.totalorder %s23, 1
      %p46 = por %p44, %p45
      %p48 = scmp.ne.s32.totalorder %s31, %s47
      %p49 = scmp.eq.s32.totalorder %s23, 0
      %p50 = por %p48, %p49
      %s52 = sadd.s32 %s51, 1
      %p55 = scmp.eq.s32.totalorder %s17, 1
      %p56 = scmp.ne.s32.totalorder %s51, %s53
      %p57 = scmp.eq.s32.totalorder %s17, 0
      %p58 = por %p56, %p57
      %p59 = scmp.ne.s32.totalorder %s51, %s53
      %p60 = scmp.eq.s32.totalorder %s22, 1
      %p61 = por %p59, %p60
      %p62 = scmp.ne.s32.totalorder %s53, %s54
      %p63 = scmp.eq.s32.totalorder %s22, 0
      %p64 = por %p62, %p63
      %p65 = scmp.ne.s32.totalorder %s53, %s54
      %p66 = scmp.eq.s32.totalorder %s23, 1
      %p67 = por %p65, %p66
      %p69 = scmp.ne.s32.totalorder %s54, %s68
      %p70 = scmp.eq.s32.totalorder %s23, 0
      %p71 = por %p69, %p70
      %s73 = sadd.s32 %s72, 1
      %p76 = scmp.eq.s32.totalorder %s17, 1
      %p77 = scmp.ne.s32.totalorder %s72, %s74
      %p78 = scmp.eq.s32.totalorder %s17, 0
      %p79 = por %p77, %p78
      %p80 = scmp.ne.s32.totalorder %s72, %s74
      %p81 = scmp.eq.s32.totalorder %s22, 1
      %p82 = por %p80, %p81
      %p83 = scmp.ne.s32.totalorder %s74, %s75
      %p84 = scmp.eq.s32.totalorder %s22, 0
      %p85 = por %p83, %p84
      %p86 = scmp.ne.s32.totalorder %s74, %s75
      %p87 = scmp.eq.s32.totalorder %s23, 1
      %p88 = por %p86, %p87
      %p90 = scmp.ne.s32.totalorder %s75, %s89
      %p91 = scmp.eq.s32.totalorder %s23, 0
      %p92 = por %p90, %p91
      %s94 = sadd.s32 %s93, 1
      %p97 = scmp.eq.s32.totalorder %s17, 1
      %p98 = scmp.ne.s32.totalorder %s93, %s95
      %p99 = scmp.eq.s32.totalorder %s17, 0
      %p100 = por %p98, %p99
      %p101 = scmp.ne.s32.totalorder %s93, %s95
      %p102 = scmp.eq.s32.totalorder %s22, 1
      %p103 = por %p101, %p102
      %p104 = scmp.ne.s32.totalorder %s95, %s96
      %p105 = scmp.eq.s32.totalorder %s22, 0
      %p106 = por %p104, %p105
      %p107 = scmp.ne.s32.totalorder %s95, %s96
      %p108 = scmp.eq.s32.totalorder %s23, 1
      %p109 = por %p107, %p108
      %p111 = scmp.ne.s32.totalorder %s96, %s110
      %p112 = scmp.eq.s32.totalorder %s23, 0
      %p113 = por %p111, %p112
      %s115 = sadd.s32 %s114, 1
      %p118 = scmp.eq.s32.totalorder %s17, 1
      %p119 = scmp.ne.s32.totalorder %s114, %s116
      %p120 = scmp.eq.s32.totalorder %s17, 0
      %p121 = por %p119, %p120
      %p122 = scmp.ne.s32.totalorder %s114, %s116
      %p123 = scmp.eq.s32.totalorder %s22, 1
      %p124 = por %p122, %p123
      %p125 = scmp.ne.s32.totalorder %s116, %s117
      %p126 = scmp.eq.s32.totalorder %s22, 0
      %p127 = por %p125, %p126
      %p128 = scmp.ne.s32.totalorder %s116, %s117
      %p129 = scmp.eq.s32.totalorder %s23, 1
      %p130 = por %p128, %p129
      %p132 = scmp.ne.s32.totalorder %s117, %s131
      %p133 = scmp.eq.s32.totalorder %s23, 0
      %p134 = por %p132, %p133
      %s135 = ssub.s32 %s17, %s24
      %p136 = scmp.eq.s32.totalorder %s135, 0
      %s138 = sadd.s32 %s137, 1
      %s139 = scalar_select %p136, %s137, %s138
      %p142 = pneg %p136
      %p143 = scmp.eq.s32.totalorder %s17, 1
      %p144 = por %p142, %p143
      %p145 = scmp.ne.s32.totalorder %s137, %s140
      %p146 = scmp.eq.s32.totalorder %s17, 0
      %p147 = por %p145, %p146
      %p148 = scmp.ne.s32.totalorder %s137, %s140
      %p149 = scmp.eq.s32.totalorder %s22, 1
      %p150 = por %p148, %p149
      %p151 = scmp.ne.s32.totalorder %s140, %s141
      %p152 = scmp.eq.s32.totalorder %s22, 0
      %p153 = por %p151, %p152
      %p154 = scmp.ne.s32.totalorder %s140, %s141
      %p155 = scmp.eq.s32.totalorder %s23, 1
      %p156 = por %p154, %p155
      %p158 = scmp.ne.s32.totalorder %s141, %s157
      %p159 = scmp.eq.s32.totalorder %s23, 0
      %p160 = por %p158, %p159
      %p161 = scmp.le.s32.totalorder 1, %s17
      %p162 = scmp.lt.s32.totalorder %s17, 3
      %p163 = pnand %p161, %p162
      %p164 = pneg %p163
      // Predicated region
      $region9: #{tpu_custom_call.1} parent=5 // pred_check
        _
      $region10: #{tpu_custom_call.1} parent=5 // pred_check_branch
        %166 = sbr.rel (%p163) target = $region12
      $region11: #{tpu_custom_call.1} parent=5 // pred_region
        %s167 = ssub.s32 %s17, 1
        // Predicated region
        $region13: #{tpu_custom_call.1} parent=11 // pred_check
          %p168 = pneg %p64
        $region14: #{tpu_custom_call.1} parent=11 // pred_check_branch
          %170 = sbr.rel (%p168) target = $region16
        $region15: #{tpu_custom_call.1} parent=11 // pred_region
          _
        $region16: #{tpu_custom_call.1} parent=11 // pred_fallthru
          _
        // Predicated region
        $region17: #{tpu_custom_call.1} parent=11 // pred_check
          %p171 = pneg %p85
        $region18: #{tpu_custom_call.1} parent=11 // pred_check_branch
          %173 = sbr.rel (%p171) target = $region20
        $region19: #{tpu_custom_call.1} parent=11 // pred_region
          _
        $region20: #{tpu_custom_call.1} parent=11 // pred_fallthru
          _
        // Predicated region
        $region21: #{tpu_custom_call.1} parent=11 // pred_check
          %p174 = pneg %p106
        $region22: #{tpu_custom_call.1} parent=11 // pred_check_branch
          %176 = sbr.rel (%p174) target = $region24
        $region23: #{tpu_custom_call.1} parent=11 // pred_region
          _
        $region24: #{tpu_custom_call.1} parent=11 // pred_fallthru
          _
        // Predicated region
        $region25: #{tpu_custom_call.1} parent=11 // pred_check
          %p177 = pneg %p127
        $region26: #{tpu_custom_call.1} parent=11 // pred_check_branch
          %179 = sbr.rel (%p177) target = $region28
        $region27: #{tpu_custom_call.1} parent=11 // pred_region
          _
        $region28: #{tpu_custom_call.1} parent=11 // pred_fallthru
          _
      $region12: #{tpu_custom_call.1} parent=5 // pred_fallthru
        _
      %p180 = scmp.lt.s32.totalorder %s17, 2
      // Predicated region
      $region29: #{tpu_custom_call.1} parent=5 // pred_check
        %p181 = pneg %p180
      $region30: #{tpu_custom_call.1} parent=5 // pred_check_branch
        %183 = sbr.rel (%p181) target = $region32
      $region31: #{tpu_custom_call.1} parent=5 // pred_region
        // Predicated region
        $region33: #{tpu_custom_call.1} parent=31 // pred_check
          %p184 = pneg %p37
        $region34: #{tpu_custom_call.1} parent=31 // pred_check_branch
          %186 = sbr.rel (%p184) target = $region36
        $region35: #{tpu_custom_call.1} parent=31 // pred_region
          %s187 = sand.u32 %s27, 1
          %s188 = scalar_lea.sflag [#allocation3], %s187
          %s189 = sand.u32 %s27, 1
          %s190 = smul.addr %s189, 16
          %s191 = scalar_lea.vmem [#allocation2], %s190
          %193 = vsyncadd %s188, 0
          %s194 = smul.addr %s17, 2
          %s195 = smul.addr %s194, 8
          %s196 = scalar_lea.hbm %s0, %s195
          %s198 = sshll.u32 %s196, 4
          %s199 = int_to_ptr.hbm [resolvable:$true] %s198
          %s200 = sshll.u32 %s191, 4
          %s201 = int_to_ptr.vmem [resolvable:$true] %s200
          %203 = dma.hbm_to_vmem [thread:$0]  %s199, 256, %s201, %s188
        $region36: #{tpu_custom_call.1} parent=31 // pred_fallthru
          _
      $region32: #{tpu_custom_call.1} parent=5 // pred_fallthru
        _
      %p204 = scmp.le.s32.totalorder 1, %s17
      %p205 = scmp.lt.s32.totalorder %s17, 3
      %p206 = pnand %p204, %p205
      %p207 = pneg %p206
      // Predicated region
      $region37: #{tpu_custom_call.1} parent=5 // pred_check
        _
      $region38: #{tpu_custom_call.1} parent=5 // pred_check_branch
        %209 = sbr.rel (%p206) target = $region40
      $region39: #{tpu_custom_call.1} parent=5 // pred_region
        %s210 = ssub.s32 %s17, 1
        %s211 = sand.u32 %s30, 1
        %s212 = scalar_lea.sflag [#allocation3], %s211
        %s213 = sand.u32 %s30, 1
        %s214 = smul.addr %s213, 16
        %s215 = scalar_lea.vmem [#allocation2], %s214
        // Predicated region
        $region41: #{tpu_custom_call.1} parent=39 // pred_check
          %p216 = pneg %p43
        $region42: #{tpu_custom_call.1} parent=39 // pred_check_branch
          %218 = sbr.rel (%p216) target = $region44
        $region43: #{tpu_custom_call.1} parent=39 // pred_region
          %220 = dma.done %s212, 256
        $region44: #{tpu_custom_call.1} parent=39 // pred_fallthru
          _
        %s221 = sand.u32 %s30, 1
        %s222 = scalar_lea.sflag [#allocation3], %s221
        %s223 = sand.u32 %s30, 1
        %s224 = smul.addr %s223, 16
        %s225 = scalar_lea.vmem [#allocation2], %s224
        %p226 = pneg %p43
        %p227 = pneg %p40
        %p228 = pneg %p64
        %p229 = pneg %p61
        %p230 = pneg %p85
        %p231 = pneg %p82
        %p232 = pneg %p106
        %p233 = pneg %p103
        %p234 = pneg %p127
        %p235 = pneg %p124
        %p236 = pneg %p153
        %p237 = pneg %p150
        %s238 = sand.u32 %s140, 1
        %s239 = scalar_lea.sflag [#allocation4], %s238
        %s240 = sand.u32 %s140, 1
        %s241 = smul.addr %s240, 16
        %s242 = scalar_lea.vmem [#allocation5], %s241
        %v243 = vld [vmem:[%s215] sm:$0xff]
        %v244 = vld [vmem:[%s215 + $0x8] sm:$0xff]
        %v245 = vadd.f32 %v243, %v244
        %246 = vadd.xlane.f32.xlu0 %v245
        %v247 = vpop.xlane.xlu0 %246
        %v248 = vmul.f32 %v247, 0.00390625
        %v249 = vld [vmem:[%s1] sm:$0x3]
        %v250 = vld [vmem:[%s2] sm:$0x3]
        %vm251 = vcmask 64512
        %v253 = vsel %vm251, %v249, 0
        %255 = vmatpush.msra.mxu0 0.0
        %256 = vmatpush.msra.mxu0 0.0
        %257 = vmatpush.msra.mxu0 0.0
        %258 = vmatpush.msra.mxu0 0.0
        %259 = vmatpush.msra.mxu0 0.0
        %260 = vmatpush.msra.mxu0 0.0
        %261 = vmatpush.msra.mxu0 0.0
        %262 = vmatpush.msra.mxu0 0.0
        %263 = vmatpush.msra.mxu0 0.0
        %264 = vmatpush.msra.mxu0 0.0
        %265 = vmatpush.msra.mxu0 0.0
        %266 = vmatpush.msra.mxu0 0.0
        %267 = vmatpush.msra.mxu0 0.0
        %268 = vmatpush.msra.mxu0 0.0
        %269 = vmatpush.msra.mxu0 0.0
        %270 = vmatpush.msra.mxu0 %v248
        %271 = vmatmul.f32.gmra.mxu0 %v253
        %v272 = vpop.f32.mrf.mxu0
        %v273 = vadd.f32 %v250, %v272
        %274 = vdwg.mxu0
        %v275 = vmax.f32 %v273, 0.0
        %v276 = vld [vmem:[%s3] sm:$0xff]
        %v277 = vld [vmem:[%s4] sm:$0xff]
        %vm278 = vcmask 15360
        %v280 = vsel %vm278, %v276, 0
        %vm282 = vcmask 1041408
        %v284 = vsel %vm282, %v275, 0
        %286 = vmatpush.msra.mxu0 0.0
        %287 = vmatpush.msra.mxu0 0.0
        %288 = vmatpush.msra.mxu0 0.0
        %289 = vmatpush.msra.mxu0 0.0
        %290 = vmatpush.msra.mxu0 0.0
        %291 = vmatpush.msra.mxu0 0.0
        %292 = vmatpush.msra.mxu0 0.0
        %293 = vmatpush.msra.mxu0 0.0
        %294 = vmatpush.msra.mxu0 0.0
        %295 = vmatpush.msra.mxu0 0.0
        %296 = vmatpush.msra.mxu0 0.0
        %297 = vmatpush.msra.mxu0 0.0
        %298 = vmatpush.msra.mxu0 0.0
        %299 = vmatpush.msra.mxu0 0.0
        %300 = vmatpush.msra.mxu0 0.0
        %301 = vmatpush.msra.mxu0 %v284
        %302 = vmatmul.f32.gmra.mxu0 %v280
        %v303 = vpop.f32.mrf.mxu0
        %v304 = vadd.f32 %v277, %v303
        %305 = vdwg.mxu0
        %v306 = vxor.u32 %v304, 2147483648
        %v307 = vmul.f32 %v306, 1.442695
        %v308 = vpow.pop %v307
        %v309 = vadd.f32 %v308, 1.0
        %v310 = vrcp.pop %v309
        %v311 = vmul.f32 %v309, %v310
        %v312 = vsub.f32 1.0, %v311
        %v313 = vmul.f32 %v310, %v312
        %v314 = vadd.f32 %v310, %v313
        %vm315 = vweird.f32 %v309
        %vm316 = vweird.f32 %v310
        %vm317 = vmor %vm315, %vm316
        %v318 = vsel %vm317, %v310, %v314
        %v319 = vand.u32 2147483647, %v309
        %vm320 = vcmp.eq.f32.partialorder %v319, 8.507059e+37
        %v321 = vand.u32 %v309, 2147483648
        %v322 = vor.u32 1.1754944e-38, %v321
        %v323 = vsel %vm320, %v322, %v318
        %v324 = vmul.f32 1.0, %v323
        %326 = vset.pattern.permute.xlu0 0
        %327 = vperm.xlu0 %326, %v324
        %v328 = vpop.permute.xlu0 %327
        %v330 = vmul.f32 %v243, %v328
        %v331 = vmul.f32 %v244, %v328
        %332 = vst [vmem:[%s242] sm:$0xff] %v330
        %333 = vst [vmem:[%s242 + $0x8] sm:$0xff] %v331
        %s334 = sand.u32 %s140, 1
        %s335 = scalar_lea.sflag [#allocation4], %s334
        %s336 = sand.u32 %s140, 1
        %s337 = smul.addr %s336, 16
        %s338 = scalar_lea.vmem [#allocation5], %s337
        // Predicated region
        $region45: #{tpu_custom_call.1} parent=39 // pred_check
          %p339 = pneg %p150
        $region46: #{tpu_custom_call.1} parent=39 // pred_check_branch
          %341 = sbr.rel (%p339) target = $region48
        $region47: #{tpu_custom_call.1} parent=39 // pred_region
          %343 = vsyncadd %s335, 0
          %s344 = smul.addr %s22, 2
          %s345 = smul.addr %s344, 8
          %s346 = scalar_lea.hbm %s5, %s345
          %s348 = sshll.u32 %s338, 4
          %s349 = int_to_ptr.vmem [resolvable:$true] %s348
          %s350 = sshll.u32 %s346, 4
          %s351 = int_to_ptr.hbm [resolvable:$true] %s350
          %353 = dma.vmem_to_hbm [thread:$0]  %s349, 256, %s351, %s335
        $region48: #{tpu_custom_call.1} parent=39 // pred_fallthru
          _
      $region40: #{tpu_custom_call.1} parent=5 // pred_fallthru
        _
      %p354 = scmp.le.s32.totalorder 2, %s17
      // Predicated region
      $region49: #{tpu_custom_call.1} parent=5 // pred_check
        %p355 = pneg %p354
      $region50: #{tpu_custom_call.1} parent=5 // pred_check_branch
        %357 = sbr.rel (%p355) target = $region52
      $region51: #{tpu_custom_call.1} parent=5 // pred_region
        %s358 = ssub.s32 %s17, 2
        // Predicated region
        $region53: #{tpu_custom_call.1} parent=51 // pred_check
          %p359 = pneg %p156
        $region54: #{tpu_custom_call.1} parent=51 // pred_check_branch
          %361 = sbr.rel (%p359) target = $region56
        $region55: #{tpu_custom_call.1} parent=51 // pred_region
          %s362 = sand.u32 %s141, 1
          %s363 = scalar_lea.sflag [#allocation4], %s362
          %s364 = sand.u32 %s141, 1
          %s365 = smul.addr %s364, 16
          %s366 = scalar_lea.vmem [#allocation5], %s365
          %368 = dma.done %s363, 256
        $region56: #{tpu_custom_call.1} parent=51 // pred_fallthru
          _
      $region52: #{tpu_custom_call.1} parent=5 // pred_fallthru
        _
    $region6: #{tpu_custom_call.1} parent=1 // loop_footer
      %s21 = sadd.s32 1, %s17
    $region7: #{tpu_custom_call.1} parent=1 // loop_footer_branch
      %16 = sbr.rel target = $region3
    $region8: #{tpu_custom_call.1} parent=1 // loop_exit
      _
    %369 = vsyncpa [#allocation3], 1
    %s370 = scalar_lea.sflag [#allocation3], 1
    %371 = vsyncpa %s370, 1
    %372 = vsyncpa [#allocation4], 1
    %s373 = scalar_lea.sflag [#allocation4], 1
    %374 = vsyncpa %s373, 1

</llo_original>
